<compile_context>
chip_gen: v5e
topology: v5e:2x2
jax: 0.10.0
libtpu: 0.0.40
codegen_flags: <defaults>
</compile_context>

<pallas_src>
import functools

import jax
import jax.numpy as jnp
from jax.experimental import pallas as pl
from jax.experimental.pallas import tpu as pltpu

TEMPERATURE = 0.2
PROJ_DIM = 64  # second projector Linear maps nOut -> 64 (fixed by the module)


def _loss_kernel(x_ref, wcat_ref, w2_ref, bfc_ref, lab_ref, o_ref,
                 *, batch_size, n_out, temperature):
    x = x_ref[...]                                   # (N, nOut) f32
    N = x.shape[0]
    B = batch_size
    inv_t = 1.0 / temperature

    # ---- fused x-LHS matmul: [projector-L1 | fc] share the same LHS --------
    y = jnp.dot(x, wcat_ref[...], preferred_element_type=jnp.float32)  # (N, nOut+C)
    h = jnp.maximum(y[:, :n_out], 0.0)                                 # ReLU(L1(x))
    logits = y[:, n_out:] + bfc_ref[...]                               # fc(x), (N, C)

    # ---- projector L2 -------------------------------------------------------
    z = jnp.dot(h, w2_ref[...], preferred_element_type=jnp.float32)    # (N, 64)

    # ---- cosine normalization (single EUP rsqrt; torch cosine eps on norm) --
    ssq = jnp.sum(z * z, axis=-1, keepdims=True)                       # (N, 1)
    zn = z * jax.lax.rsqrt(jnp.maximum(ssq, 1e-16))

    # ---- similarity matrix without an explicit transpose --------------------
    sim = jax.lax.dot_general(zn, zn, (((1,), (1,)), ((), ())),
                              preferred_element_type=jnp.float32) * inv_t  # (N, N)

    row = jax.lax.broadcasted_iota(jnp.int32, (N, N), 0)
    col = jax.lax.broadcasted_iota(jnp.int32, (N, N), 1)

    # Positives: sim[i, i +/- B], picked straight from the MXU-computed sim
    # (same accumulation path as the logsumexp terms, matching the reference).
    pair = (col == row + B) | (col == row - B)
    pos = jnp.sum(jnp.where(pair, sim, 0.0), axis=-1, keepdims=True)   # (N, 1)

    # NT-Xent: row-wise logsumexp over all j != i (the positive column appears
    # exactly once in the reference's [pos | negatives] logits, so this set is
    # identical).  Diagonal is masked explicitly — numerically safe, no
    # subtractive cancellation.
    neg_inf = jnp.float32(-1e30)
    sim_m = jnp.where(row == col, neg_inf, sim)
    m = jnp.max(sim_m, axis=-1, keepdims=True)                         # (N, 1)
    lse = m + jnp.log(jnp.sum(jnp.exp(sim_m - m), axis=-1, keepdims=True))
    nt_xent = jnp.sum(lse - pos) / N                                   # CE(sum) / N

    # ---- classification head: fc logits + CrossEntropyLoss (mean) -----------
    C = logits.shape[1]
    lm = jnp.max(logits, axis=-1, keepdims=True)
    lse2 = lm + jnp.log(jnp.sum(jnp.exp(logits - lm), axis=-1, keepdims=True))

    # labels are cat([label, label]); rows b and b+B share label[b], so fold
    # the picked-logit sum over the two row halves with one (B, C) one-hot.
    lab = lab_ref[...]                                                 # (B, 1) int32
    ccol = jax.lax.broadcasted_iota(jnp.int32, (B, C), 1)
    onehot = (ccol == lab).astype(jnp.float32)                         # (B, C)
    picked = jnp.sum(onehot * (logits[:B, :] + logits[B:, :]))
    nloss = (jnp.sum(lse2) - picked) / N

    # ---- blend ---------------------------------------------------------------
    o_ref[0] = nloss * 0.9 + nt_xent * 0.1


def prepare_params(w1, w2, w_fc, b_fc):
    """One-time parameter prep (hoisted out of the per-call path).

    Returns (w_cat, w2, b_row): the fused [projector-L1 | fc] weight and the
    fc bias as a row vector, ready to feed to loss_function_forward.
    """
    w_cat = jnp.concatenate([w1, w_fc], axis=1)       # (nOut, nOut + nClasses)
    b_row = b_fc.reshape(1, -1)                        # (1, nClasses)
    return w_cat, w2, b_row


@functools.partial(jax.jit, static_argnames=("batch_size",))
def loss_function_forward(x, label, w_cat, w2, b_row, *, batch_size):
    """x: (2*batch_size, nOut) f32, label: (batch_size,) int32 -> scalar f32."""
    N = 2 * batch_size
    assert x.shape[0] == N
    n_out = x.shape[1]

    lab2 = label.astype(jnp.int32).reshape(batch_size, 1)  # fuses under jit

    kernel = functools.partial(_loss_kernel,
                               batch_size=batch_size,
                               n_out=n_out,
                               temperature=TEMPERATURE)

    vmem = pl.BlockSpec(memory_space=pltpu.MemorySpace.VMEM)
    out = pl.pallas_call(
        kernel,
        out_shape=jax.ShapeDtypeStruct((1,), jnp.float32),
        in_specs=[vmem, vmem, vmem, vmem, vmem],
        out_specs=pl.BlockSpec(memory_space=pltpu.MemorySpace.SMEM),
    )(x, w_cat, w2, b_row, lab2)
    return out[0]


if __name__ == "__main__":
    # Small, deterministic configuration consistent with the module.
    batch_size = 4      # -> N = 8 rows in x
    nOut = 32
    nClasses = 16
    N = 2 * batch_size

    key = jax.random.PRNGKey(0)
    kx, kl, k1, k2, k3, k4 = jax.random.split(key, 6)

    x = jax.random.normal(kx, (N, nOut), dtype=jnp.float32)
    label = jax.random.randint(kl, (batch_size,), 0, nClasses, dtype=jnp.int32)

    # Deterministic synthetic parameters (shapes from the module's __init__),
    # stored as (in_features, out_features).
    w1 = jax.random.normal(k1, (nOut, nOut), dtype=jnp.float32) * 0.1      # projector L1 (no bias)
    w2 = jax.random.normal(k2, (nOut, PROJ_DIM), dtype=jnp.float32) * 0.1  # projector L2 (no bias)
    w_fc = jax.random.normal(k3, (nOut, nClasses), dtype=jnp.float32) * 0.1
    b_fc = jax.random.normal(k4, (nClasses,), dtype=jnp.float32) * 0.1

    # One-time prep, then the hot per-call path only takes (x, label).
    w_cat, w2p, b_row = prepare_params(w1, w2, w_fc, b_fc)

    loss = loss_function_forward(x, label, w_cat, w2p, b_row,
                                 batch_size=batch_size)
    jax.block_until_ready(loss)
    print("KERNEL_OK")
</pallas_src>

<mosaic_0001>
module attributes {stable_mosaic.version = 11 : i64} {
  func.func @_loss_kernel(%arg0: memref<8x32xf32, #tpu.memory_space<vmem>>, %arg1: memref<32x48xf32, #tpu.memory_space<vmem>>, %arg2: memref<32x64xf32, #tpu.memory_space<vmem>>, %arg3: memref<1x16xf32, #tpu.memory_space<vmem>>, %arg4: memref<4x1xi32, #tpu.memory_space<vmem>>, %arg5: memref<1xf32, #tpu.memory_space<smem>>) attributes {dimension_semantics = [], scalar_prefetch = 0 : i64, scratch_operands = 0 : i64, tpu.core_type = #tpu.core_type<tc>} {
    %c0 = arith.constant 0 : index
    %c0_0 = arith.constant 0 : index
    %0 = vector.load %arg0[%c0, %c0_0] : memref<8x32xf32, #tpu.memory_space<vmem>>, vector<8x32xf32>
    %c0_1 = arith.constant 0 : index
    %c0_2 = arith.constant 0 : index
    %1 = vector.load %arg1[%c0_1, %c0_2] : memref<32x48xf32, #tpu.memory_space<vmem>>, vector<32x48xf32>
    %cst = arith.constant dense<0.000000e+00> : vector<8x48xf32>
    %2 = tpu.matmul %0, %1, %cst {dimension_numbers = #tpu.dot_dimension_numbers<[1], [0], [0], [1], [0, 0, 1, 1], [], []>} : vector<8x32xf32>, vector<32x48xf32>, vector<8x48xf32> -> vector<8x48xf32>
    %3 = vector.extract_strided_slice %2 {offsets = [0, 0], sizes = [8, 32], strides = [1, 1]} : vector<8x48xf32> to vector<8x32xf32>
    %cst_3 = arith.constant 0.000000e+00 : f32
    %4 = vector.broadcast %cst_3 : f32 to vector<8x32xf32>
    %5 = arith.maximumf %3, %4 : vector<8x32xf32>
    %6 = vector.extract_strided_slice %2 {offsets = [0, 32], sizes = [8, 16], strides = [1, 1]} : vector<8x48xf32> to vector<8x16xf32>
    %c0_4 = arith.constant 0 : index
    %c0_5 = arith.constant 0 : index
    %7 = vector.load %arg3[%c0_4, %c0_5] : memref<1x16xf32, #tpu.memory_space<vmem>>, vector<1x16xf32>
    %8 = vector.broadcast %7 : vector<1x16xf32> to vector<8x16xf32>
    %9 = arith.addf %6, %8 : vector<8x16xf32>
    %c0_6 = arith.constant 0 : index
    %c0_7 = arith.constant 0 : index
    %10 = vector.load %arg2[%c0_6, %c0_7] : memref<32x64xf32, #tpu.memory_space<vmem>>, vector<32x64xf32>
    %cst_8 = arith.constant dense<0.000000e+00> : vector<8x64xf32>
    %11 = tpu.matmul %5, %10, %cst_8 {dimension_numbers = #tpu.dot_dimension_numbers<[1], [0], [0], [1], [0, 0, 1, 1], [], []>} : vector<8x32xf32>, vector<32x64xf32>, vector<8x64xf32> -> vector<8x64xf32>
    %12 = arith.mulf %11, %11 : vector<8x64xf32>
    %cst_9 = arith.constant dense<0.000000e+00> : vector<8xf32>
    %13 = vector.multi_reduction <add>, %12, %cst_9 [1] : vector<8x64xf32> to vector<8xf32>
    %14 = vector.shape_cast %13 : vector<8xf32> to vector<8x1xf32>
    %cst_10 = arith.constant 1.000000e-16 : f32
    %15 = vector.broadcast %cst_10 : f32 to vector<8x1xf32>
    %16 = arith.maximumf %14, %15 : vector<8x1xf32>
    %17 = math.rsqrt %16 : vector<8x1xf32>
    %18 = vector.broadcast %17 : vector<8x1xf32> to vector<8x64xf32>
    %19 = arith.mulf %11, %18 : vector<8x64xf32>
    %cst_11 = arith.constant dense<0.000000e+00> : vector<8x8xf32>
    %20 = tpu.matmul %19, %19, %cst_11 {dimension_numbers = #tpu.dot_dimension_numbers<[1], [1], [0], [0], [0, 0, 1, 0], [], []>} : vector<8x64xf32>, vector<8x64xf32>, vector<8x8xf32> -> vector<8x8xf32>
    %cst_12 = arith.constant 5.000000e+00 : f32
    %21 = vector.broadcast %cst_12 : f32 to vector<8x8xf32>
    %22 = arith.mulf %20, %21 : vector<8x8xf32>
    %23 = tpu.iota {dimensions = array<i32: 0>} : vector<8x8xi32>
    %24 = tpu.iota {dimensions = array<i32: 1>} : vector<8x8xi32>
    %c4_i32 = arith.constant 4 : i32
    %25 = vector.broadcast %c4_i32 : i32 to vector<8x8xi32>
    %26 = arith.addi %23, %25 : vector<8x8xi32>
    %27 = arith.cmpi eq, %24, %26 : vector<8x8xi32>
    %c4_i32_13 = arith.constant 4 : i32
    %28 = vector.broadcast %c4_i32_13 : i32 to vector<8x8xi32>
    %29 = arith.subi %23, %28 : vector<8x8xi32>
    %30 = arith.cmpi eq, %24, %29 : vector<8x8xi32>
    %31 = arith.ori %27, %30 : vector<8x8xi1>
    %cst_14 = arith.constant 0.000000e+00 : f32
    %32 = vector.broadcast %cst_14 : f32 to vector<8x8xf32>
    %33 = arith.select %31, %22, %32 : vector<8x8xi1>, vector<8x8xf32>
    %cst_15 = arith.constant dense<0.000000e+00> : vector<8xf32>
    %34 = vector.multi_reduction <add>, %33, %cst_15 [1] : vector<8x8xf32> to vector<8xf32>
    %35 = vector.shape_cast %34 : vector<8xf32> to vector<8x1xf32>
    %36 = arith.cmpi eq, %23, %24 : vector<8x8xi32>
    %cst_16 = arith.constant -1.000000e+30 : f32
    %37 = vector.broadcast %cst_16 : f32 to vector<8x8xf32>
    %38 = arith.select %36, %37, %22 : vector<8x8xi1>, vector<8x8xf32>
    %cst_17 = arith.constant dense<0xFF800000> : vector<8xf32>
    %39 = vector.multi_reduction <maximumf>, %38, %cst_17 [1] : vector<8x8xf32> to vector<8xf32>
    %40 = vector.shape_cast %39 : vector<8xf32> to vector<8x1xf32>
    %41 = vector.broadcast %40 : vector<8x1xf32> to vector<8x8xf32>
    %42 = arith.subf %38, %41 : vector<8x8xf32>
    %43 = math.exp %42 : vector<8x8xf32>
    %cst_18 = arith.constant dense<0.000000e+00> : vector<8xf32>
    %44 = vector.multi_reduction <add>, %43, %cst_18 [1] : vector<8x8xf32> to vector<8xf32>
    %45 = vector.shape_cast %44 : vector<8xf32> to vector<8x1xf32>
    %46 = math.log %45 : vector<8x1xf32>
    %47 = arith.addf %40, %46 : vector<8x1xf32>
    %48 = arith.subf %47, %35 : vector<8x1xf32>
    %49 = vector.shape_cast %48 : vector<8x1xf32> to vector<1x8x1xf32>
    %cst_19 = arith.constant dense<0.000000e+00> : vector<1xf32>
    %50 = vector.multi_reduction <add>, %49, %cst_19 [1, 2] : vector<1x8x1xf32> to vector<1xf32>
    %51 = vector.shape_cast %50 : vector<1xf32> to vector<1x1x1xf32>
    %52 = vector.extract %51[0, 0, 0] : f32 from vector<1x1x1xf32>
    %cst_20 = arith.constant 8.000000e+00 : f32
    %53 = arith.divf %52, %cst_20 : f32
    %cst_21 = arith.constant dense<0xFF800000> : vector<8xf32>
    %54 = vector.multi_reduction <maximumf>, %9, %cst_21 [1] : vector<8x16xf32> to vector<8xf32>
    %55 = vector.shape_cast %54 : vector<8xf32> to vector<8x1xf32>
    %56 = vector.broadcast %55 : vector<8x1xf32> to vector<8x16xf32>
    %57 = arith.subf %9, %56 : vector<8x16xf32>
    %58 = math.exp %57 : vector<8x16xf32>
    %cst_22 = arith.constant dense<0.000000e+00> : vector<8xf32>
    %59 = vector.multi_reduction <add>, %58, %cst_22 [1] : vector<8x16xf32> to vector<8xf32>
    %60 = vector.shape_cast %59 : vector<8xf32> to vector<8x1xf32>
    %61 = math.log %60 : vector<8x1xf32>
    %62 = arith.addf %55, %61 : vector<8x1xf32>
    %c0_23 = arith.constant 0 : index
    %c0_24 = arith.constant 0 : index
    %63 = vector.load %arg4[%c0_23, %c0_24] : memref<4x1xi32, #tpu.memory_space<vmem>>, vector<4x1xi32>
    %64 = tpu.iota {dimensions = array<i32: 1>} : vector<4x16xi32>
    %65 = vector.broadcast %63 : vector<4x1xi32> to vector<4x16xi32>
    %66 = arith.cmpi eq, %64, %65 : vector<4x16xi32>
    %67 = arith.extui %66 : vector<4x16xi1> to vector<4x16xi32>
    %68 = arith.sitofp %67 : vector<4x16xi32> to vector<4x16xf32>
    %69 = vector.extract_strided_slice %9 {offsets = [0, 0], sizes = [4, 16], strides = [1, 1]} : vector<8x16xf32> to vector<4x16xf32>
    %70 = vector.extract_strided_slice %9 {offsets = [4, 0], sizes = [4, 16], strides = [1, 1]} : vector<8x16xf32> to vector<4x16xf32>
    %71 = arith.addf %69, %70 : vector<4x16xf32>
    %72 = arith.mulf %68, %71 : vector<4x16xf32>
    %73 = vector.shape_cast %72 : vector<4x16xf32> to vector<1x4x16xf32>
    %cst_25 = arith.constant dense<0.000000e+00> : vector<1xf32>
    %74 = vector.multi_reduction <add>, %73, %cst_25 [1, 2] : vector<1x4x16xf32> to vector<1xf32>
    %75 = vector.shape_cast %74 : vector<1xf32> to vector<1x1x1xf32>
    %76 = vector.extract %75[0, 0, 0] : f32 from vector<1x1x1xf32>
    %77 = vector.shape_cast %62 : vector<8x1xf32> to vector<1x8x1xf32>
    %cst_26 = arith.constant dense<0.000000e+00> : vector<1xf32>
    %78 = vector.multi_reduction <add>, %77, %cst_26 [1, 2] : vector<1x8x1xf32> to vector<1xf32>
    %79 = vector.shape_cast %78 : vector<1xf32> to vector<1x1x1xf32>
    %80 = vector.extract %79[0, 0, 0] : f32 from vector<1x1x1xf32>
    %81 = arith.subf %80, %76 : f32
    %cst_27 = arith.constant 8.000000e+00 : f32
    %82 = arith.divf %81, %cst_27 : f32
    %cst_28 = arith.constant 0.899999976 : f32
    %83 = arith.mulf %82, %cst_28 : f32
    %cst_29 = arith.constant 1.000000e-01 : f32
    %84 = arith.mulf %53, %cst_29 : f32
    %85 = arith.addf %83, %84 : f32
    %c0_30 = arith.constant 0 : index
    %86 = memref.load %arg5[%c0_30] : memref<1xf32, #tpu.memory_space<smem>>
    memref.store %85, %arg5[%c0_30] : memref<1xf32, #tpu.memory_space<smem>>
    return
  }
}

</mosaic_0001>

<llo_original>
// kernel: loss_function_forward.1
$region0: #{loss_function_forward.1}
  #allocation0 [shape = 'u32[]', space=smem, size = 0x4, offset = 0x4, fixed_abs, tag = 'smem constant byte address 0x4 - core index']
  #allocation1 [shape = 'u32[72,128]{1,0:T(1,128)}', space=vmem, size = 0x9000, scoped, tag = 'internal scratch']
  %s0 = inlined_call_operand.hbm [shape: f32[8,32], index: 0, kind: input, shape index: {}]
  %s1 = inlined_call_operand.hbm [shape: f32[32,48], index: 1, kind: input, shape index: {}]
  %s2 = inlined_call_operand.hbm [shape: f32[32,64], index: 2, kind: input, shape index: {}]
  %s3 = inlined_call_operand.vmem [shape: f32[1,16], index: 3, kind: input, shape index: {}]
  %s4 = inlined_call_operand.vmem [shape: s32[4,1], index: 4, kind: input, shape index: {}]
  %s5 = inlined_call_operand.hbm [shape: f32[1], index: 5, kind: output, shape index: {}]
  %s6 = sld [smem:[#allocation0]]
  $region42: #{loss_function_forward.1} parent=0
    _
  %s8 = ssub.s32 1, %s6
  %s9 = scalar_select 0, %s8, %s6
  $region1: #{loss_function_forward.1} parent=0
    #allocation2 [shape = 'u8[4096]{0}', space=vmem, size = 0x1000, scoped, tag = 'input window, operand 0, single buffered']
    #allocation3 [shape = 's32[1]{0}', space=sflag, size = 0x4, scoped, tag = 'scoped memory for loss_function_forward.1']
    #allocation4 [shape = 's32[1]{0}', space=sflag, size = 0x4, scoped, tag = 'scoped memory for loss_function_forward.1']
    #allocation5 [shape = 'u8[16384]{0}', space=vmem, size = 0x4000, scoped, tag = 'input window, operand 1, single buffered']
    #allocation6 [shape = 's32[1]{0}', space=sflag, size = 0x4, scoped, tag = 'scoped memory for loss_function_forward.1']
    #allocation7 [shape = 'u8[16384]{0}', space=vmem, size = 0x4000, scoped, tag = 'input window, operand 2, single buffered']
    #allocation8 [shape = 'u8[512]{0}', space=smem, size = 0x200, scoped, tag = 'output window, operand 0, single buffered']
    %10 = vsyncpa [#allocation3], 0
    %11 = vsyncpa [#allocation6], 0
    %12 = vsyncpa [#allocation4], 0
    // Predicated region
    $region2: #{loss_function_forward.1} parent=1 // pred_check
      _
    $region3: #{loss_function_forward.1} parent=1 // pred_check_branch
      %14 = sbr.rel (0) target = $region5
    $region4: #{loss_function_forward.1} parent=1 // pred_region
      %16 = vsyncadd [#allocation3], 0
      %s18 = sshll.u32 %s0, 4
      %s19 = int_to_ptr.hbm [resolvable:$true] %s18
      %s20 = sshll.u32 [#allocation2], 4
      %s21 = int_to_ptr.vmem [resolvable:$true] %s20
      %23 = dma.hbm_to_vmem [thread:$0]  %s19, 128, %s21, [#allocation3]
    $region5: #{loss_function_forward.1} parent=1 // pred_fallthru
      _
    // Predicated region
    $region6: #{loss_function_forward.1} parent=1 // pred_check
      _
    $region7: #{loss_function_forward.1} parent=1 // pred_check_branch
      %25 = sbr.rel (0) target = $region9
    $region8: #{loss_function_forward.1} parent=1 // pred_region
      %27 = vsyncadd [#allocation6], 0
      %s28 = sshll.u32 %s1, 4
      %s29 = int_to_ptr.hbm [resolvable:$true] %s28
      %s30 = sshll.u32 [#allocation5], 4
      %s31 = int_to_ptr.vmem [resolvable:$true] %s30
      %36 = dma.hbm_to_vmem [thread:$0]  %s29, 512, %s31, [#allocation6], 128, 128, 8
    $region9: #{loss_function_forward.1} parent=1 // pred_fallthru
      _
    // Predicated region
    $region10: #{loss_function_forward.1} parent=1 // pred_check
      _
    $region11: #{loss_function_forward.1} parent=1 // pred_check_branch
      %38 = sbr.rel (0) target = $region13
    $region12: #{loss_function_forward.1} parent=1 // pred_region
      %40 = vsyncadd [#allocation6], 0
      %s41 = sshll.u32 %s2, 4
      %s42 = int_to_ptr.hbm [resolvable:$true] %s41
      %s43 = sshll.u32 [#allocation7], 4
      %s44 = int_to_ptr.vmem [resolvable:$true] %s43
      %49 = dma.hbm_to_vmem [thread:$0]  %s42, 512, %s44, [#allocation6], 128, 128, 8
    $region13: #{loss_function_forward.1} parent=1 // pred_fallthru
      _
    // Predicated region
    $region14: #{loss_function_forward.1} parent=1 // pred_check
      _
    $region15: #{loss_function_forward.1} parent=1 // pred_check_branch
      %51 = sbr.rel (0) target = $region17
    $region16: #{loss_function_forward.1} parent=1 // pred_region
      _
    $region17: #{loss_function_forward.1} parent=1 // pred_fallthru
      _
    // Predicated region
    $region18: #{loss_function_forward.1} parent=1 // pred_check
      _
    $region19: #{loss_function_forward.1} parent=1 // pred_check_branch
      %53 = sbr.rel (0) target = $region21
    $region20: #{loss_function_forward.1} parent=1 // pred_region
      _
    $region21: #{loss_function_forward.1} parent=1 // pred_fallthru
      _
    // Predicated region
    $region22: #{loss_function_forward.1} parent=1 // pred_check
      _
    $region23: #{loss_function_forward.1} parent=1 // pred_check_branch
      %55 = sbr.rel (0) target = $region25
    $region24: #{loss_function_forward.1} parent=1 // pred_region
      %57 = dma.done [#allocation3], 128
    $region25: #{loss_function_forward.1} parent=1 // pred_fallthru
      _
    // Predicated region
    $region26: #{loss_function_forward.1} parent=1 // pred_check
      _
    $region27: #{loss_function_forward.1} parent=1 // pred_check_branch
      %59 = sbr.rel (0) target = $region29
    $region28: #{loss_function_forward.1} parent=1 // pred_region
      %61 = dma.done [#allocation6], 512
    $region29: #{loss_function_forward.1} parent=1 // pred_fallthru
      _
    // Predicated region
    $region30: #{loss_function_forward.1} parent=1 // pred_check
      _
    $region31: #{loss_function_forward.1} parent=1 // pred_check_branch
      %63 = sbr.rel (0) target = $region33
    $region32: #{loss_function_forward.1} parent=1 // pred_region
      %65 = dma.done [#allocation6], 512
    $region33: #{loss_function_forward.1} parent=1 // pred_fallthru
      _
    %v66 = vld [vmem:[#allocation2] sm:$0xff]
    %v67 = vld [vmem:[#allocation5] sm:$0xff]
    %v68 = vld [vmem:[#allocation5 + $0x8] sm:$0xff]
    %v69 = vld [vmem:[#allocation5 + $0x10] sm:$0xff]
    %v70 = vld [vmem:[#allocation5 + $0x18] sm:$0xff]
    %vm71 = vcmask 261120
    %v73 = vsel %vm71, %v66, 0
    %75 = vmatpush.msra.mxu0 0.0
    %76 = vmatpush.msra.mxu0 0.0
    %77 = vmatpush.msra.mxu0 0.0
    %78 = vmatpush.msra.mxu0 0.0
    %79 = vmatpush.msra.mxu0 0.0
    %80 = vmatpush.msra.mxu0 0.0
    %81 = vmatpush.msra.mxu0 0.0
    %82 = vmatpush.msra.mxu0 0.0
    %83 = vmatpush.msra.mxu0 0.0
    %84 = vmatpush.msra.mxu0 0.0
    %85 = vmatpush.msra.mxu0 0.0
    %86 = vmatpush.msra.mxu0 0.0
    %87 = vmatpush.msra.mxu0 %v70
    %88 = vmatpush.msra.mxu0 %v69
    %89 = vmatpush.msra.mxu0 %v68
    %90 = vmatpush.msra.mxu0 %v67
    %91 = vmatmul.f32.gmra.mxu0 %v73
    %v92 = vpop.f32.mrf.mxu0
    %v93 = vadd.f32 0.0, %v92
    %94 = vdwg.mxu0
    %v95 = vmax.f32 %v93, 0.0
    %v96 = vld [vmem:[%s3] sm:$0x1]
    %v98 = vperm.slane %v96, 0
    %99 = vrot.lane.b32.xlu0 %v98, 32
    %v100 = vpop.permute.xlu0 %99
    %v102 = vadd.f32 %v93, %v100
    %v103 = vld [vmem:[#allocation7] sm:$0xff]
    %v104 = vld [vmem:[#allocation7 + $0x8] sm:$0xff]
    %v105 = vld [vmem:[#allocation7 + $0x10] sm:$0xff]
    %v106 = vld [vmem:[#allocation7 + $0x18] sm:$0xff]
    %v108 = vsel %vm71, %v95, 0
    %110 = vmatpush.msra.mxu0 0.0
    %111 = vmatpush.msra.mxu0 0.0
    %112 = vmatpush.msra.mxu0 0.0
    %113 = vmatpush.msra.mxu0 0.0
    %114 = vmatpush.msra.mxu0 0.0
    %115 = vmatpush.msra.mxu0 0.0
    %116 = vmatpush.msra.mxu0 0.0
    %117 = vmatpush.msra.mxu0 0.0
    %118 = vmatpush.msra.mxu0 0.0
    %119 = vmatpush.msra.mxu0 0.0
    %120 = vmatpush.msra.mxu0 0.0
    %121 = vmatpush.msra.mxu0 0.0
    %122 = vmatpush.msra.mxu0 %v106
    %123 = vmatpush.msra.mxu0 %v105
    %124 = vmatpush.msra.mxu0 %v104
    %125 = vmatpush.msra.mxu0 %v103
    %126 = vmatmul.f32.gmra.mxu0 %v108
    %v127 = vpop.f32.mrf.mxu0
    %v128 = vadd.f32 0.0, %v127
    %129 = vdwg.mxu0
    %v130 = vmul.f32 %v128, %v128
    %vm131 = vcmask 523264
    %v132 = vsel %vm131, %v130, 0.0
    %133 = vadd.xlane.f32.xlu0 %v132
    %v134 = vpop.xlane.xlu0 %133
    %v135 = vmax.f32 %v134, 1e-16
    %v136 = vrsqrt.pop %v135
    %v137 = vmul.f32 %v136, %v135
    %v138 = vmul.f32 %v137, %v136
    %v139 = vmul.f32 0.5, %v138
    %v140 = vsub.f32 1.5, %v139
    %v141 = vmul.f32 %v136, %v140
    %vm142 = vweird.f32 %v135
    %vm143 = vweird.f32 %v136
    %vm144 = vmor %vm142, %vm143
    %v145 = vsel %vm144, %v136, %v141
    %v146 = vmul.f32 %v128, %v145
    %v148 = vsel %vm131, %v146, 0
    %150 = vmatpush.xpose.msra.mxu0 0.0
    %151 = vmatpush.xpose.msra.mxu0 0.0
    %152 = vmatpush.xpose.msra.mxu0 0.0
    %153 = vmatpush.xpose.msra.mxu0 0.0
    %154 = vmatpush.xpose.msra.mxu0 0.0
    %155 = vmatpush.xpose.msra.mxu0 0.0
    %156 = vmatpush.xpose.msra.mxu0 0.0
    %157 = vmatpush.xpose.msra.mxu0 0.0
    %158 = vmatpush.xpose.msra.mxu0 0.0
    %159 = vmatpush.xpose.msra.mxu0 0.0
    %160 = vmatpush.xpose.msra.mxu0 0.0
    %161 = vmatpush.xpose.msra.mxu0 0.0
    %162 = vmatpush.xpose.msra.mxu0 0.0
    %163 = vmatpush.xpose.msra.mxu0 0.0
    %164 = vmatpush.xpose.msra.mxu0 0.0
    %165 = vmatpush.xpose.msra.mxu0 %v148
    %166 = vmatmul.f32.gmra.mxu0 %v148
    %v167 = vpop.f32.mrf.mxu0
    %v168 = vadd.f32 0.0, %v167
    %169 = vdwg.mxu0
    %v170 = vmul.f32 %v168, 5.0
    %v171 = vlaneseq
    %v172 = vshrl.u32 %v171, 7
    %v173 = vlaneseq
    %v174 = vand.u32 %v173, 127
    %v175 = vadd.s32 %v172, 4
    %vm176 = vcmp.eq.s32.totalorder %v174, %v175
    %v177 = vsub.s32 %v172, 4
    %vm178 = vcmp.eq.s32.totalorder %v174, %v177
    %vm179 = vmor %vm176, %vm178
    %v180 = vsel %vm179, %v170, 0.0
    %vm181 = vcmask 64512
    %v182 = vsel %vm181, %v180, 0.0
    %183 = vadd.xlane.f32.xlu0 %v182
    %v184 = vpop.xlane.xlu0 %183
    %vm185 = vcmp.eq.s32.totalorder %v172, %v174
    %v186 = vsel %vm185, -1e+30, %v170
    %v187 = vsel %vm181, %v186, -inf
    %188 = vmax.xlane.f32.xlu0 %v187
    %v189 = vpop.xlane.xlu0 %188
    %v190 = vsub.f32 %v186, %v189
    %v191 = vmul.f32 %v190, 1.442695
    %v192 = vpow.pop %v191
    %v193 = vsel %vm181, %v192, 0.0
    %194 = vadd.xlane.f32.xlu0 %v193
    %v195 = vpop.xlane.xlu0 %194
    %v196 = vlog2.pop %v195
    %v197 = vmul.f32 %v196, 0.6931472
    %v198 = vadd.f32 %v189, %v197
    %v199 = vsub.f32 %v198, %v184
    %vm200 = vcmask 7168
    %v201 = vsel %vm200, %v199, 0.0
    %202 = vadd.xlane.f32.xlu0 %v201
    %v203 = vpop.xlane.xlu0 %202
    %v204 = vrot.slane %v203, 4
    %v205 = vadd.f32 %v203, %v204
    %v206 = vrot.slane %v205, 2
    %v207 = vadd.f32 %v205, %v206
    %v208 = vrot.slane %v207, 1
    %v209 = vadd.f32 %v207, %v208
    %s210 = vtos %v209
    %v211 = vrcp.pop 8.0
    %v212 = vmul.f32 8.0, %v211
    %v213 = vsub.f32 1.0, %v212
    %v214 = vmul.f32 %v211, %v213
    %v215 = vadd.f32 %v211, %v214
    %vm216 = vweird.f32 %v211
    %v217 = vsel %vm216, %v211, %v215
    %s218 = vtos %v217
    %s219 = smul.f32 %s210, %s218
    %vm220 = vcmask 392448
    %v221 = vsel %vm220, %v102, -inf
    %222 = vmax.xlane.f32.xlu0 %v221
    %v223 = vpop.xlane.xlu0 %222
    %v224 = vsub.f32 %v102, %v223
    %v225 = vmul.f32 %v224, 1.442695
    %v226 = vpow.pop %v225
    %228 = vrot.lane.b32.xlu0 %v226, 96
    %v229 = vpop.permute.xlu0 %228
    %vm231 = vcmask 130048
    %v232 = vsel %vm231, %v229, 0.0
    %233 = vadd.xlane.f32.xlu0 %v232
    %v234 = vpop.xlane.xlu0 %233
    %v235 = vlog2.pop %v234
    %v236 = vmul.f32 %v235, 0.6931472
    %v237 = vadd.f32 %v223, %v236
    %v238 = vld [vmem:[%s4] sm:$0xf]
    %239 = vset.pattern.permute.xlu0 0
    %240 = vperm.xlu0 %239, %v238
    %v241 = vpop.permute.xlu0 %240
    %vm242 = vcmp.eq.s32.totalorder %v174, %v241
    %v243 = vsel %vm242, 1, 0
    %v244 = vcvt.s32.f32 %v243
    %v246 = vrot.slane %v102, 4
    %v248 = vadd.f32 %v102, %v246
    %250 = vrot.lane.b32.xlu0 %v248, 96
    %v251 = vpop.permute.xlu0 %250
    %v253 = vmul.f32 %v244, %v251
    %vm254 = vcmask 125952
    %v255 = vsel %vm254, %v253, 0.0
    %256 = vadd.xlane.f32.xlu0 %v255
    %v257 = vpop.xlane.xlu0 %256
    %v258 = vrot.slane %v257, 4
    %v259 = vadd.f32 %v257, %v258
    %v260 = vrot.slane %v259, 2
    %v261 = vadd.f32 %v259, %v260
    %v262 = vrot.slane %v261, 1
    %v263 = vadd.f32 %v261, %v262
    %s264 = vtos %v263
    %v265 = vsel %vm200, %v237, 0.0
    %266 = vadd.xlane.f32.xlu0 %v265
    %v267 = vpop.xlane.xlu0 %266
    %v268 = vrot.slane %v267, 4
    %v269 = vadd.f32 %v267, %v268
    %v270 = vrot.slane %v269, 2
    %v271 = vadd.f32 %v269, %v270
    %v272 = vrot.slane %v271, 1
    %v273 = vadd.f32 %v271, %v272
    %s274 = vtos %v273
    %s275 = ssub.f32 %s274, %s264
    %v276 = vrcp.pop 8.0
    %v277 = vmul.f32 8.0, %v276
    %v278 = vsub.f32 1.0, %v277
    %v279 = vmul.f32 %v276, %v278
    %v280 = vadd.f32 %v276, %v279
    %vm281 = vweird.f32 %v276
    %v282 = vsel %vm281, %v276, %v280
    %s283 = vtos %v282
    %s284 = smul.f32 %s275, %s283
    %s285 = smul.f32 %s284, 0.9
    %s286 = smul.f32 %s219, 0.1
    %s287 = sadd.f32 %s285, %s286
    %s288 = scalar_lea.smem [#allocation8], 0
    %289 = sst [smem:[%s288]] %s287
    // Predicated region
    $region34: #{loss_function_forward.1} parent=1 // pred_check
      _
    $region35: #{loss_function_forward.1} parent=1 // pred_check_branch
      %291 = sbr.rel (0) target = $region37
    $region36: #{loss_function_forward.1} parent=1 // pred_region
      %293 = vsyncadd [#allocation4], 0
      %s295 = sshll.u32 %s5, 4
      %s296 = int_to_ptr.hbm [resolvable:$true] %s295
      %298 = dma.smem_to_hbm [#allocation8], 16, %s296, [#allocation4]
    $region37: #{loss_function_forward.1} parent=1 // pred_fallthru
      _
    // Predicated region
    $region38: #{loss_function_forward.1} parent=1 // pred_check
      _
    $region39: #{loss_function_forward.1} parent=1 // pred_check_branch
      %300 = sbr.rel (0) target = $region41
    $region40: #{loss_function_forward.1} parent=1 // pred_region
      %302 = dma.done [#allocation4], 16
    $region41: #{loss_function_forward.1} parent=1 // pred_fallthru
      _
    %303 = sfence
    %304 = vsyncpa [#allocation3], 1
    %305 = vsyncpa [#allocation6], 1
    %306 = vsyncpa [#allocation4], 1

</llo_original>
